<compile_context>
chip_gen: v7x
topology: tpu7x:2x2x1
jax: 0.10.0
libtpu: 0.0.40
codegen_flags: <defaults>
</compile_context>

<pallas_src>
import functools

import jax
import jax.numpy as jnp
from jax.experimental import pallas as pl
from jax.experimental.pallas import tpu as pltpu


def _coop_prompt_kernel(prefix_ref, ctx_ref, suffix_ref, out_ref, *,
                        n_ctx, broadcast_ctx):
    # prefix_ref : (C_BLK, 1,     D)        -- SOS token embeddings
    # ctx_ref    : (1 or C_BLK, n_ctx, D)   -- learned context (generic or CSC)
    # suffix_ref : (C_BLK, S_suf, D)        -- class-name + EOS/pad embeddings
    # out_ref    : (C_BLK, S, D), S = 1 + n_ctx + S_suf
    out_dtype = out_ref.dtype
    c_blk = out_ref.shape[0]

    # SOS slab -- cast-free pure copy when dtypes already match.
    prefix = prefix_ref[...]
    if prefix.dtype != out_dtype:
        prefix = prefix.astype(out_dtype)
    out_ref[:, 0:1, :] = prefix

    # Learned-context slab -- only segment that may need a dtype cast.
    ctx = ctx_ref[...]
    if ctx.dtype != out_dtype:
        ctx = ctx.astype(out_dtype)
    if broadcast_ctx:
        # Generic context resident in VMEM (fetched once for the whole grid);
        # replicate across the class block for its own slab store.
        ctx = jnp.broadcast_to(ctx, (c_blk, n_ctx, ctx.shape[-1]))
    out_ref[:, 1:1 + n_ctx, :] = ctx

    # Class-name + EOS/pad slab (bulk of the bytes) -- pure copy.
    suffix = suffix_ref[...]
    if suffix.dtype != out_dtype:
        suffix = suffix.astype(out_dtype)
    out_ref[:, 1 + n_ctx:, :] = suffix


def coop_forward(ctx, token_prefix, token_suffix,
                 class_token_position="end", class_block=None):
    """Pallas implementation of CoOpCLIPLearner.forward().

    ctx          : (n_ctx, D) generic context  OR  (n_cls, n_ctx, D) class-specific
    token_prefix : (n_cls, 1, D)
    token_suffix : (n_cls, S - 1 - n_ctx, D)
    returns      : (n_cls, S, D) prompt embeddings (dtype of token_prefix)
    """
    if class_token_position != "end":
        # TODO(synk): 'middle'/'front' ragged (name_lens-dependent) concatenation.
        raise NotImplementedError("only class_token_position='end' is implemented")

    n_cls, _, ctx_dim = token_prefix.shape
    out_dtype = token_prefix.dtype
    out_itemsize = jnp.dtype(out_dtype).itemsize

    if ctx.ndim == 2:
        n_ctx = ctx.shape[0]
        ctx_in = ctx.reshape(1, n_ctx, ctx_dim)
        broadcast_ctx = True
    elif ctx.ndim == 3:
        if ctx.shape[0] != n_cls:
            raise ValueError(
                f"class-specific ctx has {ctx.shape[0]} classes, expected {n_cls}")
        n_ctx = ctx.shape[1]
        ctx_in = ctx
        broadcast_ctx = False
    else:
        raise ValueError("ctx must be rank 2 or 3")

    ctx_itemsize = jnp.dtype(ctx_in.dtype).itemsize
    n_suf = token_suffix.shape[1]
    seq_len = 1 + n_ctx + n_suf

    # --- chip-aware scoped-VMEM limit (~48 MiB on v7x, 64 MiB on v5e/v6e) ----
    try:
        phys_vmem = int(getattr(pltpu.get_tpu_info(), "vmem_capacity_bytes", 0))
    except Exception:
        phys_vmem = 0
    if phys_vmem <= 0:
        phys_vmem = 64 << 20  # conservative: v7x per-TC physical VMEM
    vmem_limit = int(max(min(phys_vmem * 3 // 4, 64 << 20), 32 << 20))

    # --- class-block sizing ---------------------------------------------------
    # Per-class double-buffered bytes, counting the ctx dtype for the CSC path.
    per_class_bytes = (
        1 * ctx_dim * out_itemsize           # prefix block
        + n_suf * ctx_dim * out_itemsize     # suffix block
        + seq_len * ctx_dim * out_itemsize   # output block
        + (0 if broadcast_ctx else n_ctx * ctx_dim * ctx_itemsize)
    )
    resident_ctx = 2 * n_ctx * ctx_dim * ctx_itemsize if broadcast_ctx else 0
    budget = max(vmem_limit - (8 << 20) - resident_ctx, 4 << 20)
    vmem_cap = max(budget // (2 * per_class_bytes), 1)     # 2x: double buffering

    if class_block is None:
        cap = int(min(vmem_cap, 512, n_cls))
        # Keep >= 4 grid blocks where possible so v7x can shard the parallel
        # class axis across its two TensorCores (grid-step overhead ~0.35 us
        # is negligible next to the HBM time per block).
        cap = max(1, min(cap, -(-n_cls // 4)))
        # Prefer a block that divides n_cls -> no ragged last block at all.
        c_blk = cap
        for cand in range(cap, max((2 * cap) // 3, 1) - 1, -1):
            if n_cls % cand == 0:
                c_blk = cand
                break
    else:
        c_blk = int(min(max(int(class_block), 1), n_cls))

    n_blocks = -(-n_cls // c_blk)  # ragged last block (if any): OOB writes dropped

    if broadcast_ctx:
        # Constant block index -> fetched into VMEM once for the whole grid.
        ctx_spec = pl.BlockSpec((1, n_ctx, ctx_dim), lambda i: (0, 0, 0))
    else:
        ctx_spec = pl.BlockSpec((c_blk, n_ctx, ctx_dim), lambda i: (i, 0, 0))

    kernel = functools.partial(_coop_prompt_kernel, n_ctx=n_ctx,
                               broadcast_ctx=broadcast_ctx)

    # Pure HBM-streaming copy: tell XLA so it can overlap neighbouring compute.
    bytes_accessed = (
        n_cls * (1 + n_suf) * ctx_dim * out_itemsize   # prefix + suffix reads
        + int(ctx_in.size) * ctx_itemsize              # ctx read
        + n_cls * seq_len * ctx_dim * out_itemsize     # output write
    )

    prompts = pl.pallas_call(
        kernel,
        out_shape=jax.ShapeDtypeStruct((n_cls, seq_len, ctx_dim), out_dtype),
        grid_spec=pltpu.PrefetchScalarGridSpec(
            num_scalar_prefetch=0,
            grid=(n_blocks,),
            in_specs=[
                pl.BlockSpec((c_blk, 1, ctx_dim), lambda i: (i, 0, 0)),
                ctx_spec,
                pl.BlockSpec((c_blk, n_suf, ctx_dim), lambda i: (i, 0, 0)),
            ],
            out_specs=pl.BlockSpec((c_blk, seq_len, ctx_dim), lambda i: (i, 0, 0)),
        ),
        compiler_params=pltpu.CompilerParams(
            dimension_semantics=("parallel",),   # class-block axis; megacore on v7x
            vmem_limit_bytes=vmem_limit,
        ),
        cost_estimate=pl.CostEstimate(
            flops=0, transcendentals=0, bytes_accessed=int(bytes_accessed)),
    )(token_prefix, ctx_in, token_suffix)

    return prompts


def _reference_forward(ctx, token_prefix, token_suffix):
    n_cls = token_prefix.shape[0]
    ctx = ctx.astype(token_prefix.dtype)
    if ctx.ndim == 2:
        ctx = jnp.broadcast_to(ctx[None], (n_cls,) + ctx.shape)
    return jnp.concatenate([token_prefix, ctx, token_suffix], axis=1)


if __name__ == "__main__":
    # Small shapes consistent with the module: n_cls classes, n_ctx ("m_words")
    # context tokens, ctx_dim embedding width, seq_len total prompt length.
    n_cls, n_ctx, ctx_dim, seq_len = 8, 8, 128, 24
    n_suf = seq_len - 1 - n_ctx

    key = jax.random.PRNGKey(0)
    k_ctx, k_pre, k_suf, k_csc = jax.random.split(key, 4)

    # ---- Test 1: generic (non-CSC) fp32 context, auto class-block -----------
    # nn.init.normal_(ctx_vectors, std=0.02); frozen CLIP embeddings synthetic.
    ctx_vectors = 0.02 * jax.random.normal(k_ctx, (n_ctx, ctx_dim), dtype=jnp.float32)
    token_prefix = jax.random.normal(k_pre, (n_cls, 1, ctx_dim), dtype=jnp.float32)
    token_suffix = jax.random.normal(k_suf, (n_cls, n_suf, ctx_dim), dtype=jnp.float32)

    prompts = coop_forward(ctx_vectors, token_prefix, token_suffix,
                           class_token_position="end")
    prompts = jax.block_until_ready(prompts)
    expected = _reference_forward(ctx_vectors, token_prefix, token_suffix)
    assert prompts.shape == (n_cls, seq_len, ctx_dim)
    assert jnp.array_equal(prompts, expected), "mismatch vs reference (generic ctx)"

    # ---- Test 2: class-specific ctx, mixed dtypes, ragged (unpadded) grid ---
    # fp32 learned ctx with bf16 frozen embeddings; class_block=2 with n_cls=5
    # gives 3 grid blocks with a ragged final block -- no padding or output
    # slicing anywhere.
    n_cls2 = 5
    ctx_csc = 0.02 * jax.random.normal(k_csc, (n_cls2, n_ctx, ctx_dim), dtype=jnp.float32)
    prefix2 = jax.random.normal(k_pre, (n_cls2, 1, ctx_dim), dtype=jnp.bfloat16)
    suffix2 = jax.random.normal(k_suf, (n_cls2, n_suf, ctx_dim), dtype=jnp.bfloat16)

    prompts2 = coop_forward(ctx_csc, prefix2, suffix2,
                            class_token_position="end", class_block=2)
    prompts2 = jax.block_until_ready(prompts2)
    expected2 = _reference_forward(ctx_csc, prefix2, suffix2)
    assert prompts2.shape == (n_cls2, seq_len, ctx_dim)
    assert prompts2.dtype == jnp.bfloat16
    assert jnp.allclose(prompts2.astype(jnp.float32), expected2.astype(jnp.float32),
                        rtol=1e-2, atol=1e-2), "mismatch vs reference (CSC ctx)"

    print("KERNEL_OK")
</pallas_src>

<mosaic_0001>
module attributes {stable_mosaic.version = 11 : i64} {
  func.func @_coop_prompt_kernel(%arg0: i32, %arg1: memref<2x1x128xf32, #tpu.memory_space<vmem>>, %arg2: memref<1x8x128xf32, #tpu.memory_space<vmem>>, %arg3: memref<2x15x128xf32, #tpu.memory_space<vmem>>, %arg4: memref<2x24x128xf32, #tpu.memory_space<vmem>>) attributes {dimension_semantics = [#tpu.dimension_semantics<parallel>], iteration_bounds = array<i64: 4>, scalar_prefetch = 0 : i64, scratch_operands = 0 : i64, tpu.core_type = #tpu.core_type<tc>, window_params = [{transform_indices = @transform_0, window_bounds = array<i64: 2, 1, 128>}, {pipeline_mode = #tpu.pipeline_mode<synchronous>, transform_indices = @transform_1, window_bounds = array<i64: 1, 8, 128>}, {transform_indices = @transform_2, window_bounds = array<i64: 2, 15, 128>}, {transform_indices = @transform_3, window_bounds = array<i64: 2, 24, 128>}]} {
    %c0 = arith.constant 0 : index
    %c0_0 = arith.constant 0 : index
    %c0_1 = arith.constant 0 : index
    %0 = vector.load %arg1[%c0, %c0_0, %c0_1] : memref<2x1x128xf32, #tpu.memory_space<vmem>>, vector<2x1x128xf32>
    %c0_2 = arith.constant 0 : index
    %c0_3 = arith.constant 0 : index
    %c0_4 = arith.constant 0 : index
    %1 = vector.load %arg4[%c0_2, %c0_3, %c0_4] : memref<2x24x128xf32, #tpu.memory_space<vmem>>, vector<2x1x128xf32>
    tpu.vector_store %arg4[%c0_2, %c0_3, %c0_4], %0 {strides = array<i32>} : memref<2x24x128xf32, #tpu.memory_space<vmem>>, vector<2x1x128xf32>,
    %c0_5 = arith.constant 0 : index
    %c0_6 = arith.constant 0 : index
    %c0_7 = arith.constant 0 : index
    %2 = vector.load %arg2[%c0_5, %c0_6, %c0_7] : memref<1x8x128xf32, #tpu.memory_space<vmem>>, vector<1x8x128xf32>
    %3 = vector.shape_cast %2 : vector<1x8x128xf32> to vector<1x8x128xf32>
    %4 = vector.broadcast %3 : vector<1x8x128xf32> to vector<2x8x128xf32>
    %c0_8 = arith.constant 0 : index
    %c1 = arith.constant 1 : index
    %c0_9 = arith.constant 0 : index
    %5 = vector.load %arg4[%c0_8, %c1, %c0_9] : memref<2x24x128xf32, #tpu.memory_space<vmem>>, vector<2x8x128xf32>
    tpu.vector_store %arg4[%c0_8, %c1, %c0_9], %4 {strides = array<i32>} : memref<2x24x128xf32, #tpu.memory_space<vmem>>, vector<2x8x128xf32>,
    %c0_10 = arith.constant 0 : index
    %c0_11 = arith.constant 0 : index
    %c0_12 = arith.constant 0 : index
    %6 = vector.load %arg3[%c0_10, %c0_11, %c0_12] : memref<2x15x128xf32, #tpu.memory_space<vmem>>, vector<2x15x128xf32>
    %c0_13 = arith.constant 0 : index
    %c9 = arith.constant 9 : index
    %c0_14 = arith.constant 0 : index
    %7 = vector.load %arg4[%c0_13, %c9, %c0_14] : memref<2x24x128xf32, #tpu.memory_space<vmem>>, vector<2x15x128xf32>
    tpu.vector_store %arg4[%c0_13, %c9, %c0_14], %6 {strides = array<i32>} : memref<2x24x128xf32, #tpu.memory_space<vmem>>, vector<2x15x128xf32>,
    return
  }
  func.func @transform_0(%arg0: i32) -> (i32, i32, i32) {
    %c0_i32 = arith.constant 0 : i32
    %c0_i32_0 = arith.constant 0 : i32
    %c0_i32_1 = arith.constant 0 : i32
    return %arg0, %c0_i32, %c0_i32_0 : i32, i32, i32
  }
  func.func @transform_1(%arg0: i32) -> (i32, i32, i32) {
    %c0_i32 = arith.constant 0 : i32
    %c0_i32_0 = arith.constant 0 : i32
    %c0_i32_1 = arith.constant 0 : i32
    %c0_i32_2 = arith.constant 0 : i32
    return %c0_i32, %c0_i32_0, %c0_i32_1 : i32, i32, i32
  }
  func.func @transform_2(%arg0: i32) -> (i32, i32, i32) {
    %c0_i32 = arith.constant 0 : i32
    %c0_i32_0 = arith.constant 0 : i32
    %c0_i32_1 = arith.constant 0 : i32
    return %arg0, %c0_i32, %c0_i32_0 : i32, i32, i32
  }
  func.func @transform_3(%arg0: i32) -> (i32, i32, i32) {
    %c0_i32 = arith.constant 0 : i32
    %c0_i32_0 = arith.constant 0 : i32
    %c0_i32_1 = arith.constant 0 : i32
    return %arg0, %c0_i32, %c0_i32_0 : i32, i32, i32
  }
}

</mosaic_0001>

<llo_original>
// kernel: tpu_custom_call.1
$region0: #{tpu_custom_call.1}
  #allocation0 [shape = 'u32[]', space=smem, size = 0x4, offset = 0x4, fixed_abs, tag = 'smem constant byte address 0x4 - core index']
  #allocation1 [shape = 'u32[144,128]{1,0:T(1,128)}', space=vmem, size = 0x12000, scoped, tag = 'internal scratch']
  %s0 = inlined_call_operand.vmem [shape: f32[8,1,128], index: 0, kind: input, shape index: {}]
  %s1 = inlined_call_operand.vmem [shape: f32[1,8,128], index: 1, kind: input, shape index: {}]
  %s2 = inlined_call_operand.vmem [shape: f32[8,15,128], index: 2, kind: input, shape index: {}]
  %s3 = inlined_call_operand.hbm [shape: f32[8,24,128], index: 3, kind: output, shape index: {}]
  %s4 = sld [smem:[#allocation0]]
  $region45: #{tpu_custom_call.1} parent=0
    _
  %s6 = ssub.s32 1, %s4
  %s7 = scalar_select 0, %s6, %s4
  $region1: #{tpu_custom_call.1} parent=0
    #allocation2 [shape = 'u8[49152]{0}', space=vmem, size = 0xc000, scoped, tag = 'output window, operand 0']
    #allocation3 [shape = 's32[2]{0}', space=sflag, size = 0x8, scoped, tag = 'scoped memory for tpu_custom_call.1']
    %8 = vsyncpa [#allocation3], 0
    %s9 = scalar_lea.sflag [#allocation3], 1
    %10 = vsyncpa %s9, 0
    loop: start=0, step=1, limit=6
    $region2: #{tpu_custom_call.1} parent=1 // loop_pre_header
      _
    $region3: #{tpu_custom_call.1} parent=1 // loop_header
      %s12 = sphi 0, %s16
      %p13 = scmp.ge.s32.totalorder %s12, 6
      %s22 = sphi 0, %s24
      %s25 = sphi 0, %s22
      %s26 = sphi 0, %s25
      %s42 = sphi 0, %s26
      %s46 = sphi 0, %s46
      %s48 = sphi 0, %s46
      %s49 = sphi 0, %s48
      %s63 = sphi 0, %s49
      %s69 = sphi 0, %s71
      %s72 = sphi 0, %s69
      %s73 = sphi 0, %s72
      %s89 = sphi 0, %s73
      %s95 = sphi 0, %s97
      %s98 = sphi 0, %s95
      %s99 = sphi 0, %s98
      %s115 = sphi 0, %s99
    $region4: #{tpu_custom_call.1} parent=1 // loop_header_branch
      %15 = sbr.rel (%p13) target = $region8
    $region5: #{tpu_custom_call.1} parent=1 // loop_body
      %s17 = ssub.s32 %s12, 1
      %s18 = ssub.s32 %s12, 2
      %s19 = sadd.s32 %s12, 1
      %s20 = ssub.s32 %s12, %s19
      %p21 = scmp.eq.s32.totalorder %s20, 0
      %s23 = sadd.s32 %s22, 1
      %s24 = scalar_select %p21, %s22, %s23
      %p27 = pneg %p21
      %p28 = scmp.eq.s32.totalorder %s12, 3
      %p29 = por %p27, %p28
      %p30 = scmp.ne.s32.totalorder %s22, %s25
      %p31 = scmp.eq.s32.totalorder %s12, 0
      %p32 = por %p30, %p31
      %p33 = scmp.ne.s32.totalorder %s22, %s25
      %p34 = scmp.eq.s32.totalorder %s17, 3
      %p35 = por %p33, %p34
      %p36 = scmp.ne.s32.totalorder %s25, %s26
      %p37 = scmp.eq.s32.totalorder %s17, 0
      %p38 = por %p36, %p37
      %p39 = scmp.ne.s32.totalorder %s25, %s26
      %p40 = scmp.eq.s32.totalorder %s18, 3
      %p41 = por %p39, %p40
      %p43 = scmp.ne.s32.totalorder %s26, %s42
      %p44 = scmp.eq.s32.totalorder %s18, 0
      %p45 = por %p43, %p44
      %s47 = sadd.s32 %s46, 1
      %p50 = scmp.eq.s32.totalorder %s12, 3
      %p51 = scmp.ne.s32.totalorder %s46, %s48
      %p52 = scmp.eq.s32.totalorder %s12, 0
      %p53 = por %p51, %p52
      %p54 = scmp.ne.s32.totalorder %s46, %s48
      %p55 = scmp.eq.s32.totalorder %s17, 3
      %p56 = por %p54, %p55
      %p57 = scmp.ne.s32.totalorder %s48, %s49
      %p58 = scmp.eq.s32.totalorder %s17, 0
      %p59 = por %p57, %p58
      %p60 = scmp.ne.s32.totalorder %s48, %s49
      %p61 = scmp.eq.s32.totalorder %s18, 3
      %p62 = por %p60, %p61
      %p64 = scmp.ne.s32.totalorder %s49, %s63
      %p65 = scmp.eq.s32.totalorder %s18, 0
      %p66 = por %p64, %p65
      %s67 = ssub.s32 %s12, %s19
      %p68 = scmp.eq.s32.totalorder %s67, 0
      %s70 = sadd.s32 %s69, 1
      %s71 = scalar_select %p68, %s69, %s70
      %p74 = pneg %p68
      %p75 = scmp.eq.s32.totalorder %s12, 3
      %p76 = por %p74, %p75
      %p77 = scmp.ne.s32.totalorder %s69, %s72
      %p78 = scmp.eq.s32.totalorder %s12, 0
      %p79 = por %p77, %p78
      %p80 = scmp.ne.s32.totalorder %s69, %s72
      %p81 = scmp.eq.s32.totalorder %s17, 3
      %p82 = por %p80, %p81
      %p83 = scmp.ne.s32.totalorder %s72, %s73
      %p84 = scmp.eq.s32.totalorder %s17, 0
      %p85 = por %p83, %p84
      %p86 = scmp.ne.s32.totalorder %s72, %s73
      %p87 = scmp.eq.s32.totalorder %s18, 3
      %p88 = por %p86, %p87
      %p90 = scmp.ne.s32.totalorder %s73, %s89
      %p91 = scmp.eq.s32.totalorder %s18, 0
      %p92 = por %p90, %p91
      %s93 = ssub.s32 %s12, %s19
      %p94 = scmp.eq.s32.totalorder %s93, 0
      %s96 = sadd.s32 %s95, 1
      %s97 = scalar_select %p94, %s95, %s96
      %p100 = pneg %p94
      %p101 = scmp.eq.s32.totalorder %s12, 3
      %p102 = por %p100, %p101
      %p103 = scmp.ne.s32.totalorder %s95, %s98
      %p104 = scmp.eq.s32.totalorder %s12, 0
      %p105 = por %p103, %p104
      %p106 = scmp.ne.s32.totalorder %s95, %s98
      %p107 = scmp.eq.s32.totalorder %s17, 3
      %p108 = por %p106, %p107
      %p109 = scmp.ne.s32.totalorder %s98, %s99
      %p110 = scmp.eq.s32.totalorder %s17, 0
      %p111 = por %p109, %p110
      %p112 = scmp.ne.s32.totalorder %s98, %s99
      %p113 = scmp.eq.s32.totalorder %s18, 3
      %p114 = por %p112, %p113
      %p116 = scmp.ne.s32.totalorder %s99, %s115
      %p117 = scmp.eq.s32.totalorder %s18, 0
      %p118 = por %p116, %p117
      %p119 = scmp.le.s32.totalorder 1, %s12
      %p120 = scmp.lt.s32.totalorder %s12, 5
      %p121 = pnand %p119, %p120
      %p122 = pneg %p121
      // Predicated region
      $region9: #{tpu_custom_call.1} parent=5 // pred_check
        _
      $region10: #{tpu_custom_call.1} parent=5 // pred_check_branch
        %124 = sbr.rel (%p121) target = $region12
      $region11: #{tpu_custom_call.1} parent=5 // pred_region
        %s125 = ssub.s32 %s12, 1
        // Predicated region
        $region13: #{tpu_custom_call.1} parent=11 // pred_check
          %p126 = pneg %p59
        $region14: #{tpu_custom_call.1} parent=11 // pred_check_branch
          %128 = sbr.rel (%p126) target = $region16
        $region15: #{tpu_custom_call.1} parent=11 // pred_region
          _
        $region16: #{tpu_custom_call.1} parent=11 // pred_fallthru
          _
      $region12: #{tpu_custom_call.1} parent=5 // pred_fallthru
        _
      %p129 = scmp.lt.s32.totalorder %s12, 4
      // Predicated region
      $region17: #{tpu_custom_call.1} parent=5 // pred_check
        %p130 = pneg %p129
      $region18: #{tpu_custom_call.1} parent=5 // pred_check_branch
        %132 = sbr.rel (%p130) target = $region20
      $region19: #{tpu_custom_call.1} parent=5 // pred_region
        // Predicated region
        $region21: #{tpu_custom_call.1} parent=19 // pred_check
          %p133 = pneg %p32
        $region22: #{tpu_custom_call.1} parent=19 // pred_check_branch
          %135 = sbr.rel (%p133) target = $region24
        $region23: #{tpu_custom_call.1} parent=19 // pred_region
          %s136 = smul.u32 2, %s12
          %p137 = scmp.lt.s32.totalorder %s136, 7
          %s138 = scalar_select %p137, %s136, 7
          %s139 = scalar_lea.vmem %s0, %s138
          %s140 = smul.u32 2, %s12
        $region24: #{tpu_custom_call.1} parent=19 // pred_fallthru
          _
        // Predicated region
        $region25: #{tpu_custom_call.1} parent=19 // pred_check
          %p141 = pneg %p79
        $region26: #{tpu_custom_call.1} parent=19 // pred_check_branch
          %143 = sbr.rel (%p141) target = $region28
        $region27: #{tpu_custom_call.1} parent=19 // pred_region
          %s144 = smul.u32 2, %s12
          %p145 = scmp.lt.s32.totalorder %s144, 7
          %s146 = scalar_select %p145, %s144, 7
          %s147 = smul.addr %s146, 2
          %s148 = smul.addr %s147, 8
          %s149 = scalar_lea.vmem %s2, %s148
          %s150 = smul.u32 2, %s12
        $region28: #{tpu_custom_call.1} parent=19 // pred_fallthru
          _
      $region20: #{tpu_custom_call.1} parent=5 // pred_fallthru
        _
      %p151 = scmp.le.s32.totalorder 1, %s12
      %p152 = scmp.lt.s32.totalorder %s12, 5
      %p153 = pnand %p151, %p152
      %p154 = pneg %p153
      // Predicated region
      $region29: #{tpu_custom_call.1} parent=5 // pred_check
        _
      $region30: #{tpu_custom_call.1} parent=5 // pred_check_branch
        %156 = sbr.rel (%p153) target = $region32
      $region31: #{tpu_custom_call.1} parent=5 // pred_region
        %s157 = ssub.s32 %s12, 1
        %s158 = smul.u32 2, %s17
        %p159 = scmp.lt.s32.totalorder %s158, 7
        %s160 = scalar_select %p159, %s158, 7
        %s161 = scalar_lea.vmem %s0, %s160
        %p162 = pneg %p38
        %p163 = pneg %p35
        %p164 = pneg %p59
        %p165 = pneg %p56
        %s166 = smul.u32 2, %s17
        %p167 = scmp.lt.s32.totalorder %s166, 7
        %s168 = scalar_select %p167, %s166, 7
        %s169 = smul.addr %s168, 2
        %s170 = smul.addr %s169, 8
        %s171 = scalar_lea.vmem %s2, %s170
        %p172 = pneg %p85
        %p173 = pneg %p82
        %p174 = pneg %p111
        %p175 = pneg %p108
        %s176 = sand.u32 %s98, 1
        %s177 = scalar_lea.sflag [#allocation3], %s176
        %s178 = sand.u32 %s98, 1
        %s179 = smul.addr %s178, 48
        %s180 = scalar_lea.vmem [#allocation2], %s179
        %s181 = smul.u32 2, %s17
        %p182 = scmp.lt.s32.totalorder %s181, 7
        %s183 = scalar_select %p182, %s181, 7
        %s184 = scalar_lea.vmem %s0, %s183
        %s185 = smul.u32 2, %s17
        %s186 = smul.u32 2, %s17
        %p187 = scmp.lt.s32.totalorder %s186, 7
        %s188 = scalar_select %p187, %s186, 7
        %s189 = smul.addr %s188, 2
        %s190 = smul.addr %s189, 8
        %s191 = scalar_lea.vmem %s2, %s190
        %s192 = smul.u32 2, %s17
        %s193 = smul.u32 2, %s17
        %v194 = vld [vmem:[%s184] sm:$0x1]
        %v195 = vld [vmem:[%s184 + $0x1] sm:$0x1]
        %196 = vst [vmem:[%s180] sm:$0x1] %v194
        %197 = vst [vmem:[%s180 + $0x18] sm:$0x1] %v195
        %v198 = vld [vmem:[%s1] sm:$0xff]
        %199 = vst [vmem:[%s180 + $0x1] sm:$0xff] %v198
        %200 = vst [vmem:[%s180 + $0x19] sm:$0xff] %v198
        %v201 = vld [vmem:[%s191] sm:$0xff]
        %v202 = vld [vmem:[%s191 + $0x8] sm:$0x7f]
        %v203 = vld [vmem:[%s191 + $0x10] sm:$0xff]
        %v204 = vld [vmem:[%s191 + $0x18] sm:$0x7f]
        %205 = vst [vmem:[%s180 + $0x9] sm:$0xff] %v201
        %206 = vst [vmem:[%s180 + $0x11] sm:$0x7f] %v202
        %207 = vst [vmem:[%s180 + $0x21] sm:$0xff] %v203
        %208 = vst [vmem:[%s180 + $0x29] sm:$0x7f] %v204
        %s209 = sand.u32 %s98, 1
        %s210 = scalar_lea.sflag [#allocation3], %s209
        %s211 = sand.u32 %s98, 1
        %s212 = smul.addr %s211, 48
        %s213 = scalar_lea.vmem [#allocation2], %s212
        // Predicated region
        $region33: #{tpu_custom_call.1} parent=31 // pred_check
          %p214 = pneg %p108
        $region34: #{tpu_custom_call.1} parent=31 // pred_check_branch
          %216 = sbr.rel (%p214) target = $region36
        $region35: #{tpu_custom_call.1} parent=31 // pred_region
          %s217 = smul.u32 2, %s17
          %s219 = ssub.s32 768, 768
          %220 = vsyncadd %s210, %s219
          %s221 = smul.addr %s217, 3
          %s222 = smul.addr %s221, 128
          %s223 = scalar_lea.hbm %s3, %s222
          %s224 = sshll.u32 %s213, 4
          %s225 = int_to_ptr.vmem [resolvable:$true] %s224
          %230 = dma.vmem_to_hbm [thread:$0]  %s225, 768, %s223, %s210, 128, 128, 8
        $region36: #{tpu_custom_call.1} parent=31 // pred_fallthru
          _
      $region32: #{tpu_custom_call.1} parent=5 // pred_fallthru
        _
      %p231 = scmp.le.s32.totalorder 2, %s12
      // Predicated region
      $region37: #{tpu_custom_call.1} parent=5 // pred_check
        %p232 = pneg %p231
      $region38: #{tpu_custom_call.1} parent=5 // pred_check_branch
        %234 = sbr.rel (%p232) target = $region40
      $region39: #{tpu_custom_call.1} parent=5 // pred_region
        %s235 = ssub.s32 %s12, 2
        // Predicated region
        $region41: #{tpu_custom_call.1} parent=39 // pred_check
          %p236 = pneg %p114
        $region42: #{tpu_custom_call.1} parent=39 // pred_check_branch
          %238 = sbr.rel (%p236) target = $region44
        $region43: #{tpu_custom_call.1} parent=39 // pred_region
          %s239 = sand.u32 %s99, 1
          %s240 = scalar_lea.sflag [#allocation3], %s239
          %s241 = sand.u32 %s99, 1
          %s242 = smul.addr %s241, 48
          %s243 = scalar_lea.vmem [#allocation2], %s242
          %244 = dma.done %s240, 768
        $region44: #{tpu_custom_call.1} parent=39 // pred_fallthru
          _
      $region40: #{tpu_custom_call.1} parent=5 // pred_fallthru
        _
    $region6: #{tpu_custom_call.1} parent=1 // loop_footer
      %s16 = sadd.s32 1, %s12
    $region7: #{tpu_custom_call.1} parent=1 // loop_footer_branch
      %11 = sbr.rel target = $region3
    $region8: #{tpu_custom_call.1} parent=1 // loop_exit
      _
    %245 = vsyncpa [#allocation3], 1
    %s246 = scalar_lea.sflag [#allocation3], 1
    %247 = vsyncpa %s246, 1

</llo_original>
